<compile_context>
chip_gen: v5e
topology: v5e:2x2
jax: 0.10.0
libtpu: 0.0.40
codegen_flags: <defaults>
</compile_context>

<pallas_src>
import jax
import jax.numpy as jnp
from jax.experimental import pallas as pl
from jax.experimental.pallas import tpu as pltpu


def _small_relu_kernel(xT_ref, w1_ref, b1_ref, w2_ref, b2_ref, w3_ref, o_ref):
    hp = jax.lax.Precision.HIGHEST
    xT = xT_ref[...]                                          # [D, TB] batch on lanes

    # Layer 1: Linear(D -> H) + ReLU.  K = D is tiny, but the VALU slot is the
    # one that saturates while the MXU is >90% idle, so run it on the MXU.
    h1 = jnp.dot(w1_ref[...], xT,
                 preferred_element_type=jnp.float32, precision=hp)   # [H, TB]
    h1 = jnp.maximum(h1 + b1_ref[...], 0.0)                   # bias [H,1] bcast over lanes

    # Layer 2: Linear(H -> H) + ReLU on the MXU.
    h2 = jnp.dot(w2_ref[...], h1,
                 preferred_element_type=jnp.float32, precision=hp)   # [H, TB]
    h2 = jnp.maximum(h2 + b2_ref[...], 0.0)

    # Layer 3: Linear(H -> 1, bias=False) on the MXU -> lane-dense [1, TB] tile.
    out = jnp.dot(w3_ref[...], h2,
                  preferred_element_type=jnp.float32, precision=hp)  # [1, TB]
    o_ref[...] = out.astype(o_ref.dtype)


def small_relu(x, w1, b1, w2, b2, w3, *, tb=16 * 1024):
    """SmallReLU forward.

    x : [B, D]                     (batch-major, like the PyTorch module)
    w1: [H, D],  b1: [H]           (torch nn.Linear convention: weight [out, in])
    w2: [H, H],  b2: [H]
    w3: [1, H]                     (L3, bias=False)
    returns [B, 1]
    """
    B, D = x.shape
    H = w1.shape[0]
    lane = 128

    # ---- batch-tile sizing --------------------------------------------------
    # Per-lane VMEM footprint (f32): double-buffered x tile (D padded to 8
    # sublanes), double-buffered [1, tb] output tile, and ~4 live [H, tb]
    # intermediates.  Cap total well under v7x's 64 MiB physical VMEM.
    H_pad = ((H + 7) // 8) * 8
    per_lane_bytes = 2 * 8 * 4 + 2 * 8 * 4 + 4 * H_pad * 4
    vmem_cap = 48 << 20
    tb_cap = max(lane, ((vmem_cap - (4 << 20)) // per_lane_bytes) // lane * lane)

    tb = ((int(tb) + lane - 1) // lane) * lane                # lane-aligned
    tb = max(lane, min(tb, tb_cap))

    b_pad = ((B + lane - 1) // lane) * lane
    n_steps = max(1, -(-b_pad // tb))
    # Keep >=2 grid steps when there is enough batch so the "parallel" axis can
    # actually split across v7x's two TensorCores.
    if n_steps == 1 and b_pad >= 2 * lane:
        n_steps = 2
    # Rebalance the tile so padding waste is at most `lane` rows per step.
    tb = ((-(-b_pad // n_steps) + lane - 1) // lane) * lane
    b_pad = n_steps * tb

    vmem_limit = int(min(vmem_cap,
                         max(32 << 20, per_lane_bytes * tb + (4 << 20))))

    # ---- operand prep -------------------------------------------------------
    # Single feature-major transpose (+ lane pad only when needed); see header
    # note for why the transpose is kept wrapper-side.
    xT = x.T                                                  # [D, B]
    if b_pad != B:
        xT = jnp.pad(xT, ((0, 0), (0, b_pad - B)))
    b1c = b1.reshape(H, 1)
    b2c = b2.reshape(H, 1)

    out_T = pl.pallas_call(
        _small_relu_kernel,
        out_shape=jax.ShapeDtypeStruct((1, b_pad), x.dtype),
        grid_spec=pl.GridSpec(
            grid=(n_steps,),
            in_specs=[
                pl.BlockSpec((D, tb), lambda i: (0, i)),      # streamed x tile
                pl.BlockSpec((H, D), lambda i: (0, 0)),       # resident weights/biases
                pl.BlockSpec((H, 1), lambda i: (0, 0)),
                pl.BlockSpec((H, H), lambda i: (0, 0)),
                pl.BlockSpec((H, 1), lambda i: (0, 0)),
                pl.BlockSpec((1, H), lambda i: (0, 0)),
            ],
            out_specs=pl.BlockSpec((1, tb), lambda i: (0, i)),
        ),
        compiler_params=pltpu.CompilerParams(
            dimension_semantics=("parallel",),
            vmem_limit_bytes=vmem_limit),
    )(xT, w1, b1c, w2, b2c, w3)

    return out_T[0, :B].reshape(B, 1)


def init_params(key, sphere_dim, n_hidden):
    """PyTorch-style nn.Linear init: U(-1/sqrt(fan_in), 1/sqrt(fan_in)),
    weights stored in torch [out_features, in_features] layout."""
    k1, k2, k3, k4, k5 = jax.random.split(key, 5)

    def u(k, shape, fan_in):
        bound = 1.0 / jnp.sqrt(fan_in)
        return jax.random.uniform(k, shape, jnp.float32, -bound, bound)

    w1 = u(k1, (n_hidden, sphere_dim), sphere_dim)
    b1 = u(k2, (n_hidden,), sphere_dim)
    w2 = u(k3, (n_hidden, n_hidden), n_hidden)
    b2 = u(k4, (n_hidden,), n_hidden)
    w3 = u(k5, (1, n_hidden), n_hidden)           # L3 has bias=False
    return w1, b1, w2, b2, w3


if __name__ == "__main__":
    sphere_dim, n_hidden = 3, 32

    key = jax.random.PRNGKey(0)
    kx, kp = jax.random.split(key)
    w1, b1, w2, b2, w3 = init_params(kp, sphere_dim, n_hidden)

    hp = jax.lax.Precision.HIGHEST
    for batch in (8, 300):       # grid=1 path and multi-step (grid=2, padded) path
        x = jax.random.normal(jax.random.fold_in(kx, batch),
                              (batch, sphere_dim), jnp.float32)
        out = small_relu(x, w1, b1, w2, b2, w3)
        jax.block_until_ready(out)

        # Pure-JAX reference (torch-convention weights), matched precision.
        h1 = jnp.maximum(jnp.matmul(x, w1.T, precision=hp) + b1, 0.0)
        h2 = jnp.maximum(jnp.matmul(h1, w2.T, precision=hp) + b2, 0.0)
        ref = jnp.matmul(h2, w3.T, precision=hp)

        assert out.shape == (batch, 1)
        assert jnp.allclose(out, ref, atol=1e-5, rtol=1e-5)

    print("KERNEL_OK")
</pallas_src>

<mosaic_0001>
module attributes {stable_mosaic.version = 11 : i64} {
  func.func @_small_relu_kernel(%arg0: i32, %arg1: memref<3x128xf32, #tpu.memory_space<vmem>>, %arg2: memref<32x3xf32, #tpu.memory_space<vmem>>, %arg3: memref<32x1xf32, #tpu.memory_space<vmem>>, %arg4: memref<32x32xf32, #tpu.memory_space<vmem>>, %arg5: memref<32x1xf32, #tpu.memory_space<vmem>>, %arg6: memref<1x32xf32, #tpu.memory_space<vmem>>, %arg7: memref<1x128xf32, #tpu.memory_space<vmem>>) attributes {dimension_semantics = [#tpu.dimension_semantics<parallel>], iteration_bounds = array<i64: 1>, scalar_prefetch = 0 : i64, scratch_operands = 0 : i64, tpu.core_type = #tpu.core_type<tc>, window_params = [{transform_indices = @transform_0, window_bounds = array<i64: 3, 128>}, {pipeline_mode = #tpu.pipeline_mode<synchronous>, transform_indices = @transform_1, window_bounds = array<i64: 32, 3>}, {pipeline_mode = #tpu.pipeline_mode<synchronous>, transform_indices = @transform_2, window_bounds = array<i64: 32, 1>}, {pipeline_mode = #tpu.pipeline_mode<synchronous>, transform_indices = @transform_3, window_bounds = array<i64: 32, 32>}, {pipeline_mode = #tpu.pipeline_mode<synchronous>, transform_indices = @transform_4, window_bounds = array<i64: 32, 1>}, {pipeline_mode = #tpu.pipeline_mode<synchronous>, transform_indices = @transform_5, window_bounds = array<i64: 1, 32>}, {transform_indices = @transform_6, window_bounds = array<i64: 1, 128>}]} {
    %c0 = arith.constant 0 : index
    %c0_0 = arith.constant 0 : index
    %0 = vector.load %arg1[%c0, %c0_0] : memref<3x128xf32, #tpu.memory_space<vmem>>, vector<3x128xf32>
    %c0_1 = arith.constant 0 : index
    %c0_2 = arith.constant 0 : index
    %1 = vector.load %arg2[%c0_1, %c0_2] : memref<32x3xf32, #tpu.memory_space<vmem>>, vector<32x3xf32>
    %cst = arith.constant dense<0.000000e+00> : vector<32x128xf32>
    %2 = tpu.matmul %1, %0, %cst {dimension_numbers = #tpu.dot_dimension_numbers<[1], [0], [0], [1], [0, 0, 1, 1], [], []>, precision = #tpu.contract_precision<fp32>} : vector<32x3xf32>, vector<3x128xf32>, vector<32x128xf32> -> vector<32x128xf32>
    %c0_3 = arith.constant 0 : index
    %c0_4 = arith.constant 0 : index
    %3 = vector.load %arg3[%c0_3, %c0_4] : memref<32x1xf32, #tpu.memory_space<vmem>>, vector<32x1xf32>
    %4 = vector.broadcast %3 : vector<32x1xf32> to vector<32x128xf32>
    %5 = arith.addf %2, %4 : vector<32x128xf32>
    %cst_5 = arith.constant 0.000000e+00 : f32
    %6 = vector.broadcast %cst_5 : f32 to vector<32x128xf32>
    %7 = arith.maximumf %5, %6 : vector<32x128xf32>
    %c0_6 = arith.constant 0 : index
    %c0_7 = arith.constant 0 : index
    %8 = vector.load %arg4[%c0_6, %c0_7] : memref<32x32xf32, #tpu.memory_space<vmem>>, vector<32x32xf32>
    %cst_8 = arith.constant dense<0.000000e+00> : vector<32x128xf32>
    %9 = tpu.matmul %8, %7, %cst_8 {dimension_numbers = #tpu.dot_dimension_numbers<[1], [0], [0], [1], [0, 0, 1, 1], [], []>, precision = #tpu.contract_precision<fp32>} : vector<32x32xf32>, vector<32x128xf32>, vector<32x128xf32> -> vector<32x128xf32>
    %c0_9 = arith.constant 0 : index
    %c0_10 = arith.constant 0 : index
    %10 = vector.load %arg5[%c0_9, %c0_10] : memref<32x1xf32, #tpu.memory_space<vmem>>, vector<32x1xf32>
    %11 = vector.broadcast %10 : vector<32x1xf32> to vector<32x128xf32>
    %12 = arith.addf %9, %11 : vector<32x128xf32>
    %cst_11 = arith.constant 0.000000e+00 : f32
    %13 = vector.broadcast %cst_11 : f32 to vector<32x128xf32>
    %14 = arith.maximumf %12, %13 : vector<32x128xf32>
    %c0_12 = arith.constant 0 : index
    %c0_13 = arith.constant 0 : index
    %15 = vector.load %arg6[%c0_12, %c0_13] : memref<1x32xf32, #tpu.memory_space<vmem>>, vector<1x32xf32>
    %cst_14 = arith.constant dense<0.000000e+00> : vector<1x128xf32>
    %16 = tpu.matmul %15, %14, %cst_14 {dimension_numbers = #tpu.dot_dimension_numbers<[1], [0], [0], [1], [0, 0, 1, 1], [], []>, precision = #tpu.contract_precision<fp32>} : vector<1x32xf32>, vector<32x128xf32>, vector<1x128xf32> -> vector<1x128xf32>
    %c0_15 = arith.constant 0 : index
    %c0_16 = arith.constant 0 : index
    %17 = vector.load %arg7[%c0_15, %c0_16] : memref<1x128xf32, #tpu.memory_space<vmem>>, vector<1x128xf32>
    tpu.vector_store %arg7[%c0_15, %c0_16], %16 {strides = array<i32>} : memref<1x128xf32, #tpu.memory_space<vmem>>, vector<1x128xf32>,
    return
  }
  func.func @transform_0(%arg0: i32) -> (i32, i32) {
    %c0_i32 = arith.constant 0 : i32
    %c0_i32_0 = arith.constant 0 : i32
    return %c0_i32, %arg0 : i32, i32
  }
  func.func @transform_1(%arg0: i32) -> (i32, i32) {
    %c0_i32 = arith.constant 0 : i32
    %c0_i32_0 = arith.constant 0 : i32
    %c0_i32_1 = arith.constant 0 : i32
    return %c0_i32, %c0_i32_0 : i32, i32
  }
  func.func @transform_2(%arg0: i32) -> (i32, i32) {
    %c0_i32 = arith.constant 0 : i32
    %c0_i32_0 = arith.constant 0 : i32
    %c0_i32_1 = arith.constant 0 : i32
    return %c0_i32, %c0_i32_0 : i32, i32
  }
  func.func @transform_3(%arg0: i32) -> (i32, i32) {
    %c0_i32 = arith.constant 0 : i32
    %c0_i32_0 = arith.constant 0 : i32
    %c0_i32_1 = arith.constant 0 : i32
    return %c0_i32, %c0_i32_0 : i32, i32
  }
  func.func @transform_4(%arg0: i32) -> (i32, i32) {
    %c0_i32 = arith.constant 0 : i32
    %c0_i32_0 = arith.constant 0 : i32
    %c0_i32_1 = arith.constant 0 : i32
    return %c0_i32, %c0_i32_0 : i32, i32
  }
  func.func @transform_5(%arg0: i32) -> (i32, i32) {
    %c0_i32 = arith.constant 0 : i32
    %c0_i32_0 = arith.constant 0 : i32
    %c0_i32_1 = arith.constant 0 : i32
    return %c0_i32, %c0_i32_0 : i32, i32
  }
  func.func @transform_6(%arg0: i32) -> (i32, i32) {
    %c0_i32 = arith.constant 0 : i32
    %c0_i32_0 = arith.constant 0 : i32
    return %c0_i32, %arg0 : i32, i32
  }
}

</mosaic_0001>

<llo_original>
// kernel: tpu_custom_call.1
$region0: #{tpu_custom_call.1}
  #allocation0 [shape = 'u32[]', space=smem, size = 0x4, offset = 0x4, fixed_abs, tag = 'smem constant byte address 0x4 - core index']
  #allocation1 [shape = 'u32[72,128]{1,0:T(1,128)}', space=vmem, size = 0x9000, scoped, tag = 'internal scratch']
  %s0 = inlined_call_operand.vmem [shape: f32[3,128], index: 0, kind: input, shape index: {}]
  %s1 = inlined_call_operand.vmem [shape: f32[32,3], index: 1, kind: input, shape index: {}]
  %s2 = inlined_call_operand.vmem [shape: f32[32,1], index: 2, kind: input, shape index: {}]
  %s3 = inlined_call_operand.vmem [shape: f32[32,32], index: 3, kind: input, shape index: {}]
  %s4 = inlined_call_operand.vmem [shape: f32[32,1], index: 4, kind: input, shape index: {}]
  %s5 = inlined_call_operand.vmem [shape: f32[1,32], index: 5, kind: input, shape index: {}]
  %s6 = inlined_call_operand.hbm [shape: f32[1,128], index: 6, kind: output, shape index: {}]
  %s7 = sld [smem:[#allocation0]]
  $region34: #{tpu_custom_call.1} parent=0
    _
  %s9 = ssub.s32 1, %s7
  %s10 = scalar_select 0, %s9, %s7
  $region1: #{tpu_custom_call.1} parent=0
    #allocation2 [shape = 'u8[512]{0}', space=vmem, size = 0x400, scoped, tag = 'output window, operand 0, single buffered']
    #allocation3 [shape = 's32[1]{0}', space=sflag, size = 0x4, scoped, tag = 'scoped memory for tpu_custom_call.1']
    %11 = vsyncpa [#allocation3], 0
    // Predicated region
    $region2: #{tpu_custom_call.1} parent=1 // pred_check
      _
    $region3: #{tpu_custom_call.1} parent=1 // pred_check_branch
      %13 = sbr.rel (0) target = $region5
    $region4: #{tpu_custom_call.1} parent=1 // pred_region
      _
    $region5: #{tpu_custom_call.1} parent=1 // pred_fallthru
      _
    // Predicated region
    $region6: #{tpu_custom_call.1} parent=1 // pred_check
      _
    $region7: #{tpu_custom_call.1} parent=1 // pred_check_branch
      %15 = sbr.rel (0) target = $region9
    $region8: #{tpu_custom_call.1} parent=1 // pred_region
      _
    $region9: #{tpu_custom_call.1} parent=1 // pred_fallthru
      _
    // Predicated region
    $region10: #{tpu_custom_call.1} parent=1 // pred_check
      _
    $region11: #{tpu_custom_call.1} parent=1 // pred_check_branch
      %17 = sbr.rel (0) target = $region13
    $region12: #{tpu_custom_call.1} parent=1 // pred_region
      _
    $region13: #{tpu_custom_call.1} parent=1 // pred_fallthru
      _
    // Predicated region
    $region14: #{tpu_custom_call.1} parent=1 // pred_check
      _
    $region15: #{tpu_custom_call.1} parent=1 // pred_check_branch
      %19 = sbr.rel (0) target = $region17
    $region16: #{tpu_custom_call.1} parent=1 // pred_region
      _
    $region17: #{tpu_custom_call.1} parent=1 // pred_fallthru
      _
    // Predicated region
    $region18: #{tpu_custom_call.1} parent=1 // pred_check
      _
    $region19: #{tpu_custom_call.1} parent=1 // pred_check_branch
      %21 = sbr.rel (0) target = $region21
    $region20: #{tpu_custom_call.1} parent=1 // pred_region
      _
    $region21: #{tpu_custom_call.1} parent=1 // pred_fallthru
      _
    // Predicated region
    $region22: #{tpu_custom_call.1} parent=1 // pred_check
      _
    $region23: #{tpu_custom_call.1} parent=1 // pred_check_branch
      %23 = sbr.rel (0) target = $region25
    $region24: #{tpu_custom_call.1} parent=1 // pred_region
      _
    $region25: #{tpu_custom_call.1} parent=1 // pred_fallthru
      _
    %v24 = vld [vmem:[%s0] sm:$0x7]
    %v25 = vld [vmem:[%s1] sm:$0xff]
    %v26 = vld [vmem:[%s1 + $0x8] sm:$0xff]
    %v27 = vld [vmem:[%s1 + $0x10] sm:$0xff]
    %v28 = vld [vmem:[%s1 + $0x18] sm:$0xff]
    %v29 = vld [vmem:[%s2] sm:$0xff]
    %v30 = vld [vmem:[%s2 + $0x8] sm:$0xff]
    %v31 = vld [vmem:[%s2 + $0x10] sm:$0xff]
    %v32 = vld [vmem:[%s2 + $0x18] sm:$0xff]
    %34 = vset.pattern.permute.xlu0 0
    %35 = vperm.xlu0 %34, %v29
    %v36 = vpop.permute.xlu0 %35
    %39 = vset.pattern.permute.xlu0 0
    %40 = vperm.xlu0 %39, %v30
    %v41 = vpop.permute.xlu0 %40
    %44 = vset.pattern.permute.xlu0 0
    %45 = vperm.xlu0 %44, %v31
    %v46 = vpop.permute.xlu0 %45
    %49 = vset.pattern.permute.xlu0 0
    %50 = vperm.xlu0 %49, %v32
    %v51 = vpop.permute.xlu0 %50
    %vm53 = vcmask 23552
    %v55 = vsel %vm53, %v25, 0
    %v58 = vsel %vm53, %v26, 0
    %v61 = vsel %vm53, %v27, 0
    %v64 = vsel %vm53, %v28, 0
    %vm66 = vcmask 1042432
    %v68 = vsel %vm66, %v24, 0
    %70 = vmatpush.msra.mxu0 0.0
    %71 = vmatpush.msra.mxu0 0.0
    %72 = vmatpush.msra.mxu0 0.0
    %73 = vmatpush.msra.mxu0 0.0
    %74 = vmatpush.msra.mxu0 0.0
    %75 = vmatpush.msra.mxu0 0.0
    %76 = vmatpush.msra.mxu0 0.0
    %77 = vmatpush.msra.mxu0 0.0
    %78 = vmatpush.msra.mxu0 0.0
    %79 = vmatpush.msra.mxu0 0.0
    %80 = vmatpush.msra.mxu0 0.0
    %81 = vmatpush.msra.mxu0 0.0
    %82 = vmatpush.msra.mxu0 0.0
    %83 = vmatpush.msra.mxu0 0.0
    %84 = vmatpush.msra.mxu0 0.0
    %v85 = vand.u32 %v68, 4294901760
    %86 = vmatpush.msra.mxu0 %v85
    %v87 = vand.u32 %v55, 4294901760
    %v88 = vsub.f32 %v55, %v87
    %v89 = vand.u32 %v88, 4294901760
    %v90 = vsub.f32 %v88, %v89
    %v91 = vand.u32 %v90, 4294901760
    %92 = vmatmul.f32.gmra.mxu0 %v91
    %v93 = vpop.f32.mrf.mxu0
    %v94 = vadd.f32 %v36, %v93
    %v95 = vand.u32 %v58, 4294901760
    %v96 = vsub.f32 %v58, %v95
    %v97 = vand.u32 %v96, 4294901760
    %v98 = vsub.f32 %v96, %v97
    %v99 = vand.u32 %v98, 4294901760
    %100 = vmatmul.f32.gmra.mxu0 %v99
    %v101 = vpop.f32.mrf.mxu0
    %v102 = vadd.f32 %v41, %v101
    %v103 = vand.u32 %v61, 4294901760
    %v104 = vsub.f32 %v61, %v103
    %v105 = vand.u32 %v104, 4294901760
    %v106 = vsub.f32 %v104, %v105
    %v107 = vand.u32 %v106, 4294901760
    %108 = vmatmul.f32.gmra.mxu0 %v107
    %v109 = vpop.f32.mrf.mxu0
    %v110 = vadd.f32 %v46, %v109
    %v111 = vand.u32 %v64, 4294901760
    %v112 = vsub.f32 %v64, %v111
    %v113 = vand.u32 %v112, 4294901760
    %v114 = vsub.f32 %v112, %v113
    %v115 = vand.u32 %v114, 4294901760
    %116 = vmatmul.f32.gmra.mxu0 %v115
    %v117 = vpop.f32.mrf.mxu0
    %v118 = vadd.f32 %v51, %v117
    %119 = vdwg.mxu0
    %120 = vmatpush.msra.mxu0 0.0
    %121 = vmatpush.msra.mxu0 0.0
    %122 = vmatpush.msra.mxu0 0.0
    %123 = vmatpush.msra.mxu0 0.0
    %124 = vmatpush.msra.mxu0 0.0
    %125 = vmatpush.msra.mxu0 0.0
    %126 = vmatpush.msra.mxu0 0.0
    %127 = vmatpush.msra.mxu0 0.0
    %128 = vmatpush.msra.mxu0 0.0
    %129 = vmatpush.msra.mxu0 0.0
    %130 = vmatpush.msra.mxu0 0.0
    %131 = vmatpush.msra.mxu0 0.0
    %132 = vmatpush.msra.mxu0 0.0
    %133 = vmatpush.msra.mxu0 0.0
    %134 = vmatpush.msra.mxu0 0.0
    %v135 = vand.u32 %v68, 4294901760
    %v136 = vsub.f32 %v68, %v135
    %v137 = vand.u32 %v136, 4294901760
    %v138 = vsub.f32 %v136, %v137
    %v139 = vand.u32 %v138, 4294901760
    %140 = vmatpush.msra.mxu0 %v139
    %v141 = vand.u32 %v55, 4294901760
    %142 = vmatmul.f32.gmra.mxu0 %v141
    %v143 = vpop.f32.mrf.mxu0
    %v144 = vadd.f32 %v94, %v143
    %v145 = vand.u32 %v58, 4294901760
    %146 = vmatmul.f32.gmra.mxu0 %v145
    %v147 = vpop.f32.mrf.mxu0
    %v148 = vadd.f32 %v102, %v147
    %v149 = vand.u32 %v61, 4294901760
    %150 = vmatmul.f32.gmra.mxu0 %v149
    %v151 = vpop.f32.mrf.mxu0
    %v152 = vadd.f32 %v110, %v151
    %v153 = vand.u32 %v64, 4294901760
    %154 = vmatmul.f32.gmra.mxu0 %v153
    %v155 = vpop.f32.mrf.mxu0
    %v156 = vadd.f32 %v118, %v155
    %157 = vdwg.mxu0
    %158 = vmatpush.msra.mxu0 0.0
    %159 = vmatpush.msra.mxu0 0.0
    %160 = vmatpush.msra.mxu0 0.0
    %161 = vmatpush.msra.mxu0 0.0
    %162 = vmatpush.msra.mxu0 0.0
    %163 = vmatpush.msra.mxu0 0.0
    %164 = vmatpush.msra.mxu0 0.0
    %165 = vmatpush.msra.mxu0 0.0
    %166 = vmatpush.msra.mxu0 0.0
    %167 = vmatpush.msra.mxu0 0.0
    %168 = vmatpush.msra.mxu0 0.0
    %169 = vmatpush.msra.mxu0 0.0
    %170 = vmatpush.msra.mxu0 0.0
    %171 = vmatpush.msra.mxu0 0.0
    %172 = vmatpush.msra.mxu0 0.0
    %v173 = vand.u32 %v68, 4294901760
    %v174 = vsub.f32 %v68, %v173
    %175 = vmatpush.msra.mxu0 %v174
    %v176 = vand.u32 %v55, 4294901760
    %v177 = vsub.f32 %v55, %v176
    %178 = vmatmul.f32.gmra.mxu0 %v177
    %v179 = vpop.f32.mrf.mxu0
    %v180 = vadd.f32 %v144, %v179
    %v181 = vand.u32 %v58, 4294901760
    %v182 = vsub.f32 %v58, %v181
    %183 = vmatmul.f32.gmra.mxu0 %v182
    %v184 = vpop.f32.mrf.mxu0
    %v185 = vadd.f32 %v148, %v184
    %v186 = vand.u32 %v61, 4294901760
    %v187 = vsub.f32 %v61, %v186
    %188 = vmatmul.f32.gmra.mxu0 %v187
    %v189 = vpop.f32.mrf.mxu0
    %v190 = vadd.f32 %v152, %v189
    %v191 = vand.u32 %v64, 4294901760
    %v192 = vsub.f32 %v64, %v191
    %193 = vmatmul.f32.gmra.mxu0 %v192
    %v194 = vpop.f32.mrf.mxu0
    %v195 = vadd.f32 %v156, %v194
    %196 = vdwg.mxu0
    %197 = vmatpush.msra.mxu0 0.0
    %198 = vmatpush.msra.mxu0 0.0
    %199 = vmatpush.msra.mxu0 0.0
    %200 = vmatpush.msra.mxu0 0.0
    %201 = vmatpush.msra.mxu0 0.0
    %202 = vmatpush.msra.mxu0 0.0
    %203 = vmatpush.msra.mxu0 0.0
    %204 = vmatpush.msra.mxu0 0.0
    %205 = vmatpush.msra.mxu0 0.0
    %206 = vmatpush.msra.mxu0 0.0
    %207 = vmatpush.msra.mxu0 0.0
    %208 = vmatpush.msra.mxu0 0.0
    %209 = vmatpush.msra.mxu0 0.0
    %210 = vmatpush.msra.mxu0 0.0
    %211 = vmatpush.msra.mxu0 0.0
    %v212 = vand.u32 %v68, 4294901760
    %213 = vmatpush.msra.mxu0 %v212
    %v214 = vand.u32 %v55, 4294901760
    %v215 = vsub.f32 %v55, %v214
    %v216 = vand.u32 %v215, 4294901760
    %217 = vmatmul.f32.gmra.mxu0 %v216
    %v218 = vpop.f32.mrf.mxu0
    %v219 = vadd.f32 %v180, %v218
    %v220 = vand.u32 %v58, 4294901760
    %v221 = vsub.f32 %v58, %v220
    %v222 = vand.u32 %v221, 4294901760
    %223 = vmatmul.f32.gmra.mxu0 %v222
    %v224 = vpop.f32.mrf.mxu0
    %v225 = vadd.f32 %v185, %v224
    %v226 = vand.u32 %v61, 4294901760
    %v227 = vsub.f32 %v61, %v226
    %v228 = vand.u32 %v227, 4294901760
    %229 = vmatmul.f32.gmra.mxu0 %v228
    %v230 = vpop.f32.mrf.mxu0
    %v231 = vadd.f32 %v190, %v230
    %v232 = vand.u32 %v64, 4294901760
    %v233 = vsub.f32 %v64, %v232
    %v234 = vand.u32 %v233, 4294901760
    %235 = vmatmul.f32.gmra.mxu0 %v234
    %v236 = vpop.f32.mrf.mxu0
    %v237 = vadd.f32 %v195, %v236
    %238 = vdwg.mxu0
    %239 = vmatpush.msra.mxu0 0.0
    %240 = vmatpush.msra.mxu0 0.0
    %241 = vmatpush.msra.mxu0 0.0
    %242 = vmatpush.msra.mxu0 0.0
    %243 = vmatpush.msra.mxu0 0.0
    %244 = vmatpush.msra.mxu0 0.0
    %245 = vmatpush.msra.mxu0 0.0
    %246 = vmatpush.msra.mxu0 0.0
    %247 = vmatpush.msra.mxu0 0.0
    %248 = vmatpush.msra.mxu0 0.0
    %249 = vmatpush.msra.mxu0 0.0
    %250 = vmatpush.msra.mxu0 0.0
    %251 = vmatpush.msra.mxu0 0.0
    %252 = vmatpush.msra.mxu0 0.0
    %253 = vmatpush.msra.mxu0 0.0
    %v254 = vand.u32 %v68, 4294901760
    %v255 = vsub.f32 %v68, %v254
    %v256 = vand.u32 %v255, 4294901760
    %257 = vmatpush.msra.mxu0 %v256
    %v258 = vand.u32 %v55, 4294901760
    %259 = vmatmul.f32.gmra.mxu0 %v258
    %v260 = vpop.f32.mrf.mxu0
    %v261 = vadd.f32 %v219, %v260
    %v262 = vand.u32 %v58, 4294901760
    %263 = vmatmul.f32.gmra.mxu0 %v262
    %v264 = vpop.f32.mrf.mxu0
    %v265 = vadd.f32 %v225, %v264
    %v266 = vand.u32 %v61, 4294901760
    %267 = vmatmul.f32.gmra.mxu0 %v266
    %v268 = vpop.f32.mrf.mxu0
    %v269 = vadd.f32 %v231, %v268
    %v270 = vand.u32 %v64, 4294901760
    %271 = vmatmul.f32.gmra.mxu0 %v270
    %v272 = vpop.f32.mrf.mxu0
    %v273 = vadd.f32 %v237, %v272
    %274 = vdwg.mxu0
    %275 = vmatpush.msra.mxu0 0.0
    %276 = vmatpush.msra.mxu0 0.0
    %277 = vmatpush.msra.mxu0 0.0
    %278 = vmatpush.msra.mxu0 0.0
    %279 = vmatpush.msra.mxu0 0.0
    %280 = vmatpush.msra.mxu0 0.0
    %281 = vmatpush.msra.mxu0 0.0
    %282 = vmatpush.msra.mxu0 0.0
    %283 = vmatpush.msra.mxu0 0.0
    %284 = vmatpush.msra.mxu0 0.0
    %285 = vmatpush.msra.mxu0 0.0
    %286 = vmatpush.msra.mxu0 0.0
    %287 = vmatpush.msra.mxu0 0.0
    %288 = vmatpush.msra.mxu0 0.0
    %289 = vmatpush.msra.mxu0 0.0
    %v290 = vand.u32 %v68, 4294901760
    %291 = vmatpush.msra.mxu0 %v290
    %v292 = vand.u32 %v55, 4294901760
    %293 = vmatmul.f32.gmra.mxu0 %v292
    %v294 = vpop.f32.mrf.mxu0
    %v295 = vadd.f32 %v261, %v294
    %v296 = vand.u32 %v58, 4294901760
    %297 = vmatmul.f32.gmra.mxu0 %v296
    %v298 = vpop.f32.mrf.mxu0
    %v299 = vadd.f32 %v265, %v298
    %v300 = vand.u32 %v61, 4294901760
    %301 = vmatmul.f32.gmra.mxu0 %v300
    %v302 = vpop.f32.mrf.mxu0
    %v303 = vadd.f32 %v269, %v302
    %v304 = vand.u32 %v64, 4294901760
    %305 = vmatmul.f32.gmra.mxu0 %v304
    %v306 = vpop.f32.mrf.mxu0
    %v307 = vadd.f32 %v273, %v306
    %308 = vdwg.mxu0
    %v309 = vmax.f32 %v295, 0.0
    %v310 = vmax.f32 %v299, 0.0
    %v311 = vmax.f32 %v303, 0.0
    %v312 = vmax.f32 %v307, 0.0
    %v313 = vld [vmem:[%s3] sm:$0xff]
    %v314 = vld [vmem:[%s3 + $0x8] sm:$0xff]
    %v315 = vld [vmem:[%s3 + $0x10] sm:$0xff]
    %v316 = vld [vmem:[%s3 + $0x18] sm:$0xff]
    %v317 = vld [vmem:[%s4] sm:$0xff]
    %v318 = vld [vmem:[%s4 + $0x8] sm:$0xff]
    %v319 = vld [vmem:[%s4 + $0x10] sm:$0xff]
    %v320 = vld [vmem:[%s4 + $0x18] sm:$0xff]
    %322 = vset.pattern.permute.xlu0 0
    %323 = vperm.xlu0 %322, %v317
    %v324 = vpop.permute.xlu0 %323
    %327 = vset.pattern.permute.xlu0 0
    %328 = vperm.xlu0 %327, %v318
    %v329 = vpop.permute.xlu0 %328
    %332 = vset.pattern.permute.xlu0 0
    %333 = vperm.xlu0 %332, %v319
    %v334 = vpop.permute.xlu0 %333
    %337 = vset.pattern.permute.xlu0 0
    %338 = vperm.xlu0 %337, %v320
    %v339 = vpop.permute.xlu0 %338
    %vm341 = vcmask 261120
    %v343 = vsel %vm341, %v313, 0
    %v346 = vsel %vm341, %v314, 0
    %v349 = vsel %vm341, %v315, 0
    %v352 = vsel %vm341, %v316, 0
    %354 = vmatpush.msra.mxu0 0.0
    %355 = vmatpush.msra.mxu0 0.0
    %356 = vmatpush.msra.mxu0 0.0
    %357 = vmatpush.msra.mxu0 0.0
    %358 = vmatpush.msra.mxu0 0.0
    %359 = vmatpush.msra.mxu0 0.0
    %360 = vmatpush.msra.mxu0 0.0
    %361 = vmatpush.msra.mxu0 0.0
    %362 = vmatpush.msra.mxu0 0.0
    %363 = vmatpush.msra.mxu0 0.0
    %364 = vmatpush.msra.mxu0 0.0
    %365 = vmatpush.msra.mxu0 0.0
    %v366 = vand.u32 %v312, 4294901760
    %367 = vmatpush.msra.mxu0 %v366
    %v368 = vand.u32 %v311, 4294901760
    %369 = vmatpush.msra.mxu0 %v368
    %v370 = vand.u32 %v310, 4294901760
    %371 = vmatpush.msra.mxu0 %v370
    %v372 = vand.u32 %v309, 4294901760
    %373 = vmatpush.msra.mxu0 %v372
    %v374 = vand.u32 %v343, 4294901760
    %v375 = vsub.f32 %v343, %v374
    %v376 = vand.u32 %v375, 4294901760
    %v377 = vsub.f32 %v375, %v376
    %v378 = vand.u32 %v377, 4294901760
    %379 = vmatmul.f32.gmra.mxu0 %v378
    %v380 = vpop.f32.mrf.mxu0
    %v381 = vadd.f32 %v324, %v380
    %v382 = vand.u32 %v346, 4294901760
    %v383 = vsub.f32 %v346, %v382
    %v384 = vand.u32 %v383, 4294901760
    %v385 = vsub.f32 %v383, %v384
    %v386 = vand.u32 %v385, 4294901760
    %387 = vmatmul.f32.gmra.mxu0 %v386
    %v388 = vpop.f32.mrf.mxu0
    %v389 = vadd.f32 %v329, %v388
    %v390 = vand.u32 %v349, 4294901760
    %v391 = vsub.f32 %v349, %v390
    %v392 = vand.u32 %v391, 4294901760
    %v393 = vsub.f32 %v391, %v392
    %v394 = vand.u32 %v393, 4294901760
    %395 = vmatmul.f32.gmra.mxu0 %v394
    %v396 = vpop.f32.mrf.mxu0
    %v397 = vadd.f32 %v334, %v396
    %v398 = vand.u32 %v352, 4294901760
    %v399 = vsub.f32 %v352, %v398
    %v400 = vand.u32 %v399, 4294901760
    %v401 = vsub.f32 %v399, %v400
    %v402 = vand.u32 %v401, 4294901760
    %403 = vmatmul.f32.gmra.mxu0 %v402
    %v404 = vpop.f32.mrf.mxu0
    %v405 = vadd.f32 %v339, %v404
    %406 = vdwg.mxu0
    %407 = vmatpush.msra.mxu0 0.0
    %408 = vmatpush.msra.mxu0 0.0
    %409 = vmatpush.msra.mxu0 0.0
    %410 = vmatpush.msra.mxu0 0.0
    %411 = vmatpush.msra.mxu0 0.0
    %412 = vmatpush.msra.mxu0 0.0
    %413 = vmatpush.msra.mxu0 0.0
    %414 = vmatpush.msra.mxu0 0.0
    %415 = vmatpush.msra.mxu0 0.0
    %416 = vmatpush.msra.mxu0 0.0
    %417 = vmatpush.msra.mxu0 0.0
    %418 = vmatpush.msra.mxu0 0.0
    %v419 = vand.u32 %v312, 4294901760
    %v420 = vsub.f32 %v312, %v419
    %v421 = vand.u32 %v420, 4294901760
    %v422 = vsub.f32 %v420, %v421
    %v423 = vand.u32 %v422, 4294901760
    %424 = vmatpush.msra.mxu0 %v423
    %v425 = vand.u32 %v311, 4294901760
    %v426 = vsub.f32 %v311, %v425
    %v427 = vand.u32 %v426, 4294901760
    %v428 = vsub.f32 %v426, %v427
    %v429 = vand.u32 %v428, 4294901760
    %430 = vmatpush.msra.mxu0 %v429
    %v431 = vand.u32 %v310, 4294901760
    %v432 = vsub.f32 %v310, %v431
    %v433 = vand.u32 %v432, 4294901760
    %v434 = vsub.f32 %v432, %v433
    %v435 = vand.u32 %v434, 4294901760
    %436 = vmatpush.msra.mxu0 %v435
    %v437 = vand.u32 %v309, 4294901760
    %v438 = vsub.f32 %v309, %v437
    %v439 = vand.u32 %v438, 4294901760
    %v440 = vsub.f32 %v438, %v439
    %v441 = vand.u32 %v440, 4294901760
    %442 = vmatpush.msra.mxu0 %v441
    %v443 = vand.u32 %v343, 4294901760
    %444 = vmatmul.f32.gmra.mxu0 %v443
    %v445 = vpop.f32.mrf.mxu0
    %v446 = vadd.f32 %v381, %v445
    %v447 = vand.u32 %v346, 4294901760
    %448 = vmatmul.f32.gmra.mxu0 %v447
    %v449 = vpop.f32.mrf.mxu0
    %v450 = vadd.f32 %v389, %v449
    %v451 = vand.u32 %v349, 4294901760
    %452 = vmatmul.f32.gmra.mxu0 %v451
    %v453 = vpop.f32.mrf.mxu0
    %v454 = vadd.f32 %v397, %v453
    %v455 = vand.u32 %v352, 4294901760
    %456 = vmatmul.f32.gmra.mxu0 %v455
    %v457 = vpop.f32.mrf.mxu0
    %v458 = vadd.f32 %v405, %v457
    %459 = vdwg.mxu0
    %460 = vmatpush.msra.mxu0 0.0
    %461 = vmatpush.msra.mxu0 0.0
    %462 = vmatpush.msra.mxu0 0.0
    %463 = vmatpush.msra.mxu0 0.0
    %464 = vmatpush.msra.mxu0 0.0
    %465 = vmatpush.msra.mxu0 0.0
    %466 = vmatpush.msra.mxu0 0.0
    %467 = vmatpush.msra.mxu0 0.0
    %468 = vmatpush.msra.mxu0 0.0
    %469 = vmatpush.msra.mxu0 0.0
    %470 = vmatpush.msra.mxu0 0.0
    %471 = vmatpush.msra.mxu0 0.0
    %v472 = vand.u32 %v312, 4294901760
    %v473 = vsub.f32 %v312, %v472
    %474 = vmatpush.msra.mxu0 %v473
    %v475 = vand.u32 %v311, 4294901760
    %v476 = vsub.f32 %v311, %v475
    %477 = vmatpush.msra.mxu0 %v476
    %v478 = vand.u32 %v310, 4294901760
    %v479 = vsub.f32 %v310, %v478
    %480 = vmatpush.msra.mxu0 %v479
    %v481 = vand.u32 %v309, 4294901760
    %v482 = vsub.f32 %v309, %v481
    %483 = vmatpush.msra.mxu0 %v482
    %v484 = vand.u32 %v343, 4294901760
    %v485 = vsub.f32 %v343, %v484
    %486 = vmatmul.f32.gmra.mxu0 %v485
    %v487 = vpop.f32.mrf.mxu0
    %v488 = vadd.f32 %v446, %v487
    %v489 = vand.u32 %v346, 4294901760
    %v490 = vsub.f32 %v346, %v489
    %491 = vmatmul.f32.gmra.mxu0 %v490
    %v492 = vpop.f32.mrf.mxu0
    %v493 = vadd.f32 %v450, %v492
    %v494 = vand.u32 %v349, 4294901760
    %v495 = vsub.f32 %v349, %v494
    %496 = vmatmul.f32.gmra.mxu0 %v495
    %v497 = vpop.f32.mrf.mxu0
    %v498 = vadd.f32 %v454, %v497
    %v499 = vand.u32 %v352, 4294901760
    %v500 = vsub.f32 %v352, %v499
    %501 = vmatmul.f32.gmra.mxu0 %v500
    %v502 = vpop.f32.mrf.mxu0
    %v503 = vadd.f32 %v458, %v502
    %504 = vdwg.mxu0
    %505 = vmatpush.msra.mxu0 0.0
    %506 = vmatpush.msra.mxu0 0.0
    %507 = vmatpush.msra.mxu0 0.0
    %508 = vmatpush.msra.mxu0 0.0
    %509 = vmatpush.msra.mxu0 0.0
    %510 = vmatpush.msra.mxu0 0.0
    %511 = vmatpush.msra.mxu0 0.0
    %512 = vmatpush.msra.mxu0 0.0
    %513 = vmatpush.msra.mxu0 0.0
    %514 = vmatpush.msra.mxu0 0.0
    %515 = vmatpush.msra.mxu0 0.0
    %516 = vmatpush.msra.mxu0 0.0
    %v517 = vand.u32 %v312, 4294901760
    %518 = vmatpush.msra.mxu0 %v517
    %v519 = vand.u32 %v311, 4294901760
    %520 = vmatpush.msra.mxu0 %v519
    %v521 = vand.u32 %v310, 4294901760
    %522 = vmatpush.msra.mxu0 %v521
    %v523 = vand.u32 %v309, 4294901760
    %524 = vmatpush.msra.mxu0 %v523
    %v525 = vand.u32 %v343, 4294901760
    %v526 = vsub.f32 %v343, %v525
    %v527 = vand.u32 %v526, 4294901760
    %528 = vmatmul.f32.gmra.mxu0 %v527
    %v529 = vpop.f32.mrf.mxu0
    %v530 = vadd.f32 %v488, %v529
    %v531 = vand.u32 %v346, 4294901760
    %v532 = vsub.f32 %v346, %v531
    %v533 = vand.u32 %v532, 4294901760
    %534 = vmatmul.f32.gmra.mxu0 %v533
    %v535 = vpop.f32.mrf.mxu0
    %v536 = vadd.f32 %v493, %v535
    %v537 = vand.u32 %v349, 4294901760
    %v538 = vsub.f32 %v349, %v537
    %v539 = vand.u32 %v538, 4294901760
    %540 = vmatmul.f32.gmra.mxu0 %v539
    %v541 = vpop.f32.mrf.mxu0
    %v542 = vadd.f32 %v498, %v541
    %v543 = vand.u32 %v352, 4294901760
    %v544 = vsub.f32 %v352, %v543
    %v545 = vand.u32 %v544, 4294901760
    %546 = vmatmul.f32.gmra.mxu0 %v545
    %v547 = vpop.f32.mrf.mxu0
    %v548 = vadd.f32 %v503, %v547
    %549 = vdwg.mxu0
    %550 = vmatpush.msra.mxu0 0.0
    %551 = vmatpush.msra.mxu0 0.0
    %552 = vmatpush.msra.mxu0 0.0
    %553 = vmatpush.msra.mxu0 0.0
    %554 = vmatpush.msra.mxu0 0.0
    %555 = vmatpush.msra.mxu0 0.0
    %556 = vmatpush.msra.mxu0 0.0
    %557 = vmatpush.msra.mxu0 0.0
    %558 = vmatpush.msra.mxu0 0.0
    %559 = vmatpush.msra.mxu0 0.0
    %560 = vmatpush.msra.mxu0 0.0
    %561 = vmatpush.msra.mxu0 0.0
    %v562 = vand.u32 %v312, 4294901760
    %v563 = vsub.f32 %v312, %v562
    %v564 = vand.u32 %v563, 4294901760
    %565 = vmatpush.msra.mxu0 %v564
    %v566 = vand.u32 %v311, 4294901760
    %v567 = vsub.f32 %v311, %v566
    %v568 = vand.u32 %v567, 4294901760
    %569 = vmatpush.msra.mxu0 %v568
    %v570 = vand.u32 %v310, 4294901760
    %v571 = vsub.f32 %v310, %v570
    %v572 = vand.u32 %v571, 4294901760
    %573 = vmatpush.msra.mxu0 %v572
    %v574 = vand.u32 %v309, 4294901760
    %v575 = vsub.f32 %v309, %v574
    %v576 = vand.u32 %v575, 4294901760
    %577 = vmatpush.msra.mxu0 %v576
    %v578 = vand.u32 %v343, 4294901760
    %579 = vmatmul.f32.gmra.mxu0 %v578
    %v580 = vpop.f32.mrf.mxu0
    %v581 = vadd.f32 %v530, %v580
    %v582 = vand.u32 %v346, 4294901760
    %583 = vmatmul.f32.gmra.mxu0 %v582
    %v584 = vpop.f32.mrf.mxu0
    %v585 = vadd.f32 %v536, %v584
    %v586 = vand.u32 %v349, 4294901760
    %587 = vmatmul.f32.gmra.mxu0 %v586
    %v588 = vpop.f32.mrf.mxu0
    %v589 = vadd.f32 %v542, %v588
    %v590 = vand.u32 %v352, 4294901760
    %591 = vmatmul.f32.gmra.mxu0 %v590
    %v592 = vpop.f32.mrf.mxu0
    %v593 = vadd.f32 %v548, %v592
    %594 = vdwg.mxu0
    %595 = vmatpush.msra.mxu0 0.0
    %596 = vmatpush.msra.mxu0 0.0
    %597 = vmatpush.msra.mxu0 0.0
    %598 = vmatpush.msra.mxu0 0.0
    %599 = vmatpush.msra.mxu0 0.0
    %600 = vmatpush.msra.mxu0 0.0
    %601 = vmatpush.msra.mxu0 0.0
    %602 = vmatpush.msra.mxu0 0.0
    %603 = vmatpush.msra.mxu0 0.0
    %604 = vmatpush.msra.mxu0 0.0
    %605 = vmatpush.msra.mxu0 0.0
    %606 = vmatpush.msra.mxu0 0.0
    %v607 = vand.u32 %v312, 4294901760
    %608 = vmatpush.msra.mxu0 %v607
    %v609 = vand.u32 %v311, 4294901760
    %610 = vmatpush.msra.mxu0 %v609
    %v611 = vand.u32 %v310, 4294901760
    %612 = vmatpush.msra.mxu0 %v611
    %v613 = vand.u32 %v309, 4294901760
    %614 = vmatpush.msra.mxu0 %v613
    %v615 = vand.u32 %v343, 4294901760
    %616 = vmatmul.f32.gmra.mxu0 %v615
    %v617 = vpop.f32.mrf.mxu0
    %v618 = vadd.f32 %v581, %v617
    %v619 = vand.u32 %v346, 4294901760
    %620 = vmatmul.f32.gmra.mxu0 %v619
    %v621 = vpop.f32.mrf.mxu0
    %v622 = vadd.f32 %v585, %v621
    %v623 = vand.u32 %v349, 4294901760
    %624 = vmatmul.f32.gmra.mxu0 %v623
    %v625 = vpop.f32.mrf.mxu0
    %v626 = vadd.f32 %v589, %v625
    %v627 = vand.u32 %v352, 4294901760
    %628 = vmatmul.f32.gmra.mxu0 %v627
    %v629 = vpop.f32.mrf.mxu0
    %v630 = vadd.f32 %v593, %v629
    %631 = vdwg.mxu0
    %v632 = vmax.f32 %v618, 0.0
    %v633 = vmax.f32 %v622, 0.0
    %v634 = vmax.f32 %v626, 0.0
    %v635 = vmax.f32 %v630, 0.0
    %v636 = vld [vmem:[%s5] sm:$0x1]
    %v638 = vsel %vm341, %v636, 0
    %640 = vmatpush.msra.mxu0 0.0
    %641 = vmatpush.msra.mxu0 0.0
    %642 = vmatpush.msra.mxu0 0.0
    %643 = vmatpush.msra.mxu0 0.0
    %644 = vmatpush.msra.mxu0 0.0
    %645 = vmatpush.msra.mxu0 0.0
    %646 = vmatpush.msra.mxu0 0.0
    %647 = vmatpush.msra.mxu0 0.0
    %648 = vmatpush.msra.mxu0 0.0
    %649 = vmatpush.msra.mxu0 0.0
    %650 = vmatpush.msra.mxu0 0.0
    %651 = vmatpush.msra.mxu0 0.0
    %v652 = vand.u32 %v635, 4294901760
    %653 = vmatpush.msra.mxu0 %v652
    %v654 = vand.u32 %v634, 4294901760
    %655 = vmatpush.msra.mxu0 %v654
    %v656 = vand.u32 %v633, 4294901760
    %657 = vmatpush.msra.mxu0 %v656
    %v658 = vand.u32 %v632, 4294901760
    %659 = vmatpush.msra.mxu0 %v658
    %v660 = vand.u32 %v638, 4294901760
    %v661 = vsub.f32 %v638, %v660
    %v662 = vand.u32 %v661, 4294901760
    %v663 = vsub.f32 %v661, %v662
    %v664 = vand.u32 %v663, 4294901760
    %665 = vmatmul.f32.gmra.mxu0 %v664
    %v666 = vpop.f32.mrf.mxu0
    %v667 = vadd.f32 0.0, %v666
    %668 = vdwg.mxu0
    %669 = vmatpush.msra.mxu0 0.0
    %670 = vmatpush.msra.mxu0 0.0
    %671 = vmatpush.msra.mxu0 0.0
    %672 = vmatpush.msra.mxu0 0.0
    %673 = vmatpush.msra.mxu0 0.0
    %674 = vmatpush.msra.mxu0 0.0
    %675 = vmatpush.msra.mxu0 0.0
    %676 = vmatpush.msra.mxu0 0.0
    %677 = vmatpush.msra.mxu0 0.0
    %678 = vmatpush.msra.mxu0 0.0
    %679 = vmatpush.msra.mxu0 0.0
    %680 = vmatpush.msra.mxu0 0.0
    %v681 = vand.u32 %v635, 4294901760
    %v682 = vsub.f32 %v635, %v681
    %v683 = vand.u32 %v682, 4294901760
    %v684 = vsub.f32 %v682, %v683
    %v685 = vand.u32 %v684, 4294901760
    %686 = vmatpush.msra.mxu0 %v685
    %v687 = vand.u32 %v634, 4294901760
    %v688 = vsub.f32 %v634, %v687
    %v689 = vand.u32 %v688, 4294901760
    %v690 = vsub.f32 %v688, %v689
    %v691 = vand.u32 %v690, 4294901760
    %692 = vmatpush.msra.mxu0 %v691
    %v693 = vand.u32 %v633, 4294901760
    %v694 = vsub.f32 %v633, %v693
    %v695 = vand.u32 %v694, 4294901760
    %v696 = vsub.f32 %v694, %v695
    %v697 = vand.u32 %v696, 4294901760
    %698 = vmatpush.msra.mxu0 %v697
    %v699 = vand.u32 %v632, 4294901760
    %v700 = vsub.f32 %v632, %v699
    %v701 = vand.u32 %v700, 4294901760
    %v702 = vsub.f32 %v700, %v701
    %v703 = vand.u32 %v702, 4294901760
    %704 = vmatpush.msra.mxu0 %v703
    %v705 = vand.u32 %v638, 4294901760
    %706 = vmatmul.f32.gmra.mxu0 %v705
    %v707 = vpop.f32.mrf.mxu0
    %v708 = vadd.f32 %v667, %v707
    %709 = vdwg.mxu0
    %710 = vmatpush.msra.mxu0 0.0
    %711 = vmatpush.msra.mxu0 0.0
    %712 = vmatpush.msra.mxu0 0.0
    %713 = vmatpush.msra.mxu0 0.0
    %714 = vmatpush.msra.mxu0 0.0
    %715 = vmatpush.msra.mxu0 0.0
    %716 = vmatpush.msra.mxu0 0.0
    %717 = vmatpush.msra.mxu0 0.0
    %718 = vmatpush.msra.mxu0 0.0
    %719 = vmatpush.msra.mxu0 0.0
    %720 = vmatpush.msra.mxu0 0.0
    %721 = vmatpush.msra.mxu0 0.0
    %v722 = vand.u32 %v635, 4294901760
    %v723 = vsub.f32 %v635, %v722
    %724 = vmatpush.msra.mxu0 %v723
    %v725 = vand.u32 %v634, 4294901760
    %v726 = vsub.f32 %v634, %v725
    %727 = vmatpush.msra.mxu0 %v726
    %v728 = vand.u32 %v633, 4294901760
    %v729 = vsub.f32 %v633, %v728
    %730 = vmatpush.msra.mxu0 %v729
    %v731 = vand.u32 %v632, 4294901760
    %v732 = vsub.f32 %v632, %v731
    %733 = vmatpush.msra.mxu0 %v732
    %v734 = vand.u32 %v638, 4294901760
    %v735 = vsub.f32 %v638, %v734
    %736 = vmatmul.f32.gmra.mxu0 %v735
    %v737 = vpop.f32.mrf.mxu0
    %v738 = vadd.f32 %v708, %v737
    %739 = vdwg.mxu0
    %740 = vmatpush.msra.mxu0 0.0
    %741 = vmatpush.msra.mxu0 0.0
    %742 = vmatpush.msra.mxu0 0.0
    %743 = vmatpush.msra.mxu0 0.0
    %744 = vmatpush.msra.mxu0 0.0
    %745 = vmatpush.msra.mxu0 0.0
    %746 = vmatpush.msra.mxu0 0.0
    %747 = vmatpush.msra.mxu0 0.0
    %748 = vmatpush.msra.mxu0 0.0
    %749 = vmatpush.msra.mxu0 0.0
    %750 = vmatpush.msra.mxu0 0.0
    %751 = vmatpush.msra.mxu0 0.0
    %v752 = vand.u32 %v635, 4294901760
    %753 = vmatpush.msra.mxu0 %v752
    %v754 = vand.u32 %v634, 4294901760
    %755 = vmatpush.msra.mxu0 %v754
    %v756 = vand.u32 %v633, 4294901760
    %757 = vmatpush.msra.mxu0 %v756
    %v758 = vand.u32 %v632, 4294901760
    %759 = vmatpush.msra.mxu0 %v758
    %v760 = vand.u32 %v638, 4294901760
    %v761 = vsub.f32 %v638, %v760
    %v762 = vand.u32 %v761, 4294901760
    %763 = vmatmul.f32.gmra.mxu0 %v762
    %v764 = vpop.f32.mrf.mxu0
    %v765 = vadd.f32 %v738, %v764
    %766 = vdwg.mxu0
    %767 = vmatpush.msra.mxu0 0.0
    %768 = vmatpush.msra.mxu0 0.0
    %769 = vmatpush.msra.mxu0 0.0
    %770 = vmatpush.msra.mxu0 0.0
    %771 = vmatpush.msra.mxu0 0.0
    %772 = vmatpush.msra.mxu0 0.0
    %773 = vmatpush.msra.mxu0 0.0
    %774 = vmatpush.msra.mxu0 0.0
    %775 = vmatpush.msra.mxu0 0.0
    %776 = vmatpush.msra.mxu0 0.0
    %777 = vmatpush.msra.mxu0 0.0
    %778 = vmatpush.msra.mxu0 0.0
    %v779 = vand.u32 %v635, 4294901760
    %v780 = vsub.f32 %v635, %v779
    %v781 = vand.u32 %v780, 4294901760
    %782 = vmatpush.msra.mxu0 %v781
    %v783 = vand.u32 %v634, 4294901760
    %v784 = vsub.f32 %v634, %v783
    %v785 = vand.u32 %v784, 4294901760
    %786 = vmatpush.msra.mxu0 %v785
    %v787 = vand.u32 %v633, 4294901760
    %v788 = vsub.f32 %v633, %v787
    %v789 = vand.u32 %v788, 4294901760
    %790 = vmatpush.msra.mxu0 %v789
    %v791 = vand.u32 %v632, 4294901760
    %v792 = vsub.f32 %v632, %v791
    %v793 = vand.u32 %v792, 4294901760
    %794 = vmatpush.msra.mxu0 %v793
    %v795 = vand.u32 %v638, 4294901760
    %796 = vmatmul.f32.gmra.mxu0 %v795
    %v797 = vpop.f32.mrf.mxu0
    %v798 = vadd.f32 %v765, %v797
    %799 = vdwg.mxu0
    %800 = vmatpush.msra.mxu0 0.0
    %801 = vmatpush.msra.mxu0 0.0
    %802 = vmatpush.msra.mxu0 0.0
    %803 = vmatpush.msra.mxu0 0.0
    %804 = vmatpush.msra.mxu0 0.0
    %805 = vmatpush.msra.mxu0 0.0
    %806 = vmatpush.msra.mxu0 0.0
    %807 = vmatpush.msra.mxu0 0.0
    %808 = vmatpush.msra.mxu0 0.0
    %809 = vmatpush.msra.mxu0 0.0
    %810 = vmatpush.msra.mxu0 0.0
    %811 = vmatpush.msra.mxu0 0.0
    %v812 = vand.u32 %v635, 4294901760
    %813 = vmatpush.msra.mxu0 %v812
    %v814 = vand.u32 %v634, 4294901760
    %815 = vmatpush.msra.mxu0 %v814
    %v816 = vand.u32 %v633, 4294901760
    %817 = vmatpush.msra.mxu0 %v816
    %v818 = vand.u32 %v632, 4294901760
    %819 = vmatpush.msra.mxu0 %v818
    %v820 = vand.u32 %v638, 4294901760
    %821 = vmatmul.f32.gmra.mxu0 %v820
    %v822 = vpop.f32.mrf.mxu0
    %v823 = vadd.f32 %v798, %v822
    %824 = vdwg.mxu0
    %825 = vst [vmem:[#allocation2] sm:$0x1] %v823
    // Predicated region
    $region26: #{tpu_custom_call.1} parent=1 // pred_check
      _
    $region27: #{tpu_custom_call.1} parent=1 // pred_check_branch
      %827 = sbr.rel (0) target = $region29
    $region28: #{tpu_custom_call.1} parent=1 // pred_region
      %829 = vsyncadd [#allocation3], 0
      %s831 = sshll.u32 [#allocation2], 4
      %s832 = int_to_ptr.vmem [resolvable:$true] %s831
      %s833 = sshll.u32 %s6, 4
      %s834 = int_to_ptr.hbm [resolvable:$true] %s833
      %836 = dma.vmem_to_hbm [thread:$0]  %s832, 16, %s834, [#allocation3]
    $region29: #{tpu_custom_call.1} parent=1 // pred_fallthru
      _
    // Predicated region
    $region30: #{tpu_custom_call.1} parent=1 // pred_check
      _
    $region31: #{tpu_custom_call.1} parent=1 // pred_check_branch
      %838 = sbr.rel (0) target = $region33
    $region32: #{tpu_custom_call.1} parent=1 // pred_region
      %840 = dma.done [#allocation3], 16
    $region33: #{tpu_custom_call.1} parent=1 // pred_fallthru
      _
    %841 = vsyncpa [#allocation3], 1

</llo_original>
